<compile_context>
chip_gen: v6e
topology: v6e:2x2x1
jax: 0.10.0
libtpu: 0.0.40
codegen_flags: <defaults>
</compile_context>

<pallas_src>
import functools
import math
import random

import jax
import jax.numpy as jnp
from jax.experimental import pallas as pl
from jax.experimental.pallas import tpu as pltpu


@functools.lru_cache(maxsize=None)
def _build_channel_shuffle_call(perm, shape, dtype_name):
    """Build (and cache) a jitted pallas_call for a static channel permutation."""
    dtype = jnp.dtype(dtype_name)
    C = shape[0]

    def kernel(x_hbm, o_hbm, sems):
        # Pure HBM->HBM permutation: one DMA per output channel, issue all, wait all.
        copies = [
            pltpu.make_async_copy(x_hbm.at[perm[c]], o_hbm.at[c], sems.at[c])
            for c in range(C)
        ]
        for cp in copies:   # issue all C copies; they overlap on the DMA engines
            cp.start()
        for cp in copies:   # then block until every channel has landed
            cp.wait()

    total_bytes = math.prod(shape) * dtype.itemsize
    call = pl.pallas_call(
        kernel,
        out_shape=jax.ShapeDtypeStruct(shape, dtype),
        in_specs=[pl.BlockSpec(memory_space=pl.ANY)],   # leave input in HBM (no auto-DMA)
        out_specs=pl.BlockSpec(memory_space=pl.ANY),    # output written only via DMA
        scratch_shapes=[pltpu.SemaphoreType.DMA((C,))],
        cost_estimate=pl.CostEstimate(
            flops=0, transcendentals=0, bytes_accessed=2 * total_bytes
        ),
    )
    return jax.jit(call)


def channel_shuffle_pallas(x: jnp.ndarray, perm) -> jnp.ndarray:
    """Return x[list(perm)] (permutation over the leading/channel axis) via Pallas."""
    perm = tuple(int(p) for p in perm)
    C = x.shape[0]
    if sorted(perm) != list(range(C)):
        raise ValueError(f"perm {perm} is not a permutation of range({C})")
    call = _build_channel_shuffle_call(
        perm, tuple(int(d) for d in x.shape), x.dtype.name
    )
    return call(x)


# Below a few hundred KiB the fixed kernel-dispatch/grid overhead dominates; a plain
# gather (which also fuses into neighbouring XLA ops) is the right choice there.
_DEFAULT_MIN_PALLAS_BYTES = 256 * 1024


def channel_shuffle(x, perm, *, min_pallas_bytes=_DEFAULT_MIN_PALLAS_BYTES):
    nbytes = x.size * jnp.dtype(x.dtype).itemsize
    if nbytes < min_pallas_bytes:
        return x[jnp.asarray(tuple(int(p) for p in perm), dtype=jnp.int32)]
    return channel_shuffle_pallas(x, perm)


class ChannelShuffle:
    """JAX/Pallas port of the PyTorch ChannelShuffle transform.

    Only the key 'image_prime' is supported (the reference module raises ValueError
    for any other key).
    """

    def __init__(self, apply_keys="all", seed: int = 0,
                 min_pallas_bytes: int = _DEFAULT_MIN_PALLAS_BYTES):
        self.apply_keys = apply_keys
        self.min_pallas_bytes = min_pallas_bytes
        # Deterministic permutation source (replaces Python's module-level random.shuffle).
        self._rng = random.Random(seed)

    def __call__(self, sample: dict) -> dict:
        if self.apply_keys == "all":
            apply_keys = list(sample)
        else:
            apply_keys = self.apply_keys
        for key in apply_keys:
            val = sample[key]
            if key == "image_prime":
                indices = list(range(3))
                self._rng.shuffle(indices)
                sample[key] = channel_shuffle(
                    val, indices, min_pallas_bytes=self.min_pallas_bytes
                )
            else:
                raise ValueError
        return sample


if __name__ == "__main__":
    key = jax.random.PRNGKey(0)
    # Small CHW image: 3 channels, 64x64 spatial (48 KiB).
    x = jax.random.normal(key, (3, 64, 64), dtype=jnp.float32)

    # min_pallas_bytes=0 forces the Pallas HBM->HBM DMA path even at this tiny size
    # (the production default would route such small images to the plain gather).
    transform = ChannelShuffle(apply_keys="all", seed=0, min_pallas_bytes=0)
    sample = {"image_prime": x}
    out = transform(sample)["image_prime"]
    out = jax.block_until_ready(out)

    # Reference: the same deterministic permutation computed in plain JAX.
    check_rng = random.Random(0)
    indices = list(range(3))
    check_rng.shuffle(indices)
    ref = x[jnp.asarray(indices)]
    assert out.shape == x.shape and out.dtype == x.dtype
    assert bool(jnp.array_equal(out, ref))

    # Exercise a second (explicit) permutation to hit another cached compiled variant.
    out2 = jax.block_until_ready(channel_shuffle_pallas(x, (2, 0, 1)))
    assert bool(jnp.array_equal(out2, x[jnp.asarray([2, 0, 1])]))

    print("KERNEL_OK")
</pallas_src>

<mosaic_0001>
module attributes {stable_mosaic.version = 11 : i64} {
  func.func @kernel(%arg0: memref<3x64x64xf32, #tpu.memory_space<any>>, %arg1: memref<3x64x64xf32, #tpu.memory_space<any>>, %arg2: memref<3x!tpu.dma_semaphore, #tpu.memory_space<semaphore_mem>>) attributes {dimension_semantics = [], scalar_prefetch = 0 : i64, scratch_operands = 1 : i64, tpu.core_type = #tpu.core_type<tc>} {
    %c0_i32 = arith.constant 0 : i32
    %c0_i32_0 = arith.constant 0 : i32
    %c0_i32_1 = arith.constant 0 : i32
    %c0_i32_2 = arith.constant 0 : i32
    %c0_i32_3 = arith.constant 0 : i32
    %0 = tpu.memref_slice %arg0[%c0_i32, %c0_i32_2, %c0_i32_3] : memref<3x64x64xf32, #tpu.memory_space<any>> -> memref<1x64x64xf32, #tpu.memory_space<any>>
    %1 = tpu.memref_squeeze %0 : memref<1x64x64xf32, #tpu.memory_space<any>> -> memref<64x64xf32, #tpu.memory_space<any>>
    %c0_i32_4 = arith.constant 0 : i32
    %c0_i32_5 = arith.constant 0 : i32
    %2 = tpu.memref_slice %arg1[%c0_i32_0, %c0_i32_4, %c0_i32_5] : memref<3x64x64xf32, #tpu.memory_space<any>> -> memref<1x64x64xf32, #tpu.memory_space<any>>
    %3 = tpu.memref_squeeze %2 : memref<1x64x64xf32, #tpu.memory_space<any>> -> memref<64x64xf32, #tpu.memory_space<any>>
    %4 = tpu.memref_slice %arg2[%c0_i32_1] : memref<3x!tpu.dma_semaphore, #tpu.memory_space<semaphore_mem>> -> memref<1x!tpu.dma_semaphore, #tpu.memory_space<semaphore_mem>>
    %5 = tpu.memref_squeeze %4 : memref<1x!tpu.dma_semaphore, #tpu.memory_space<semaphore_mem>> -> memref<!tpu.dma_semaphore, #tpu.memory_space<semaphore_mem>>
    tpu.enqueue_dma source(%1 : memref<64x64xf32, #tpu.memory_space<any>>) target(%3 : memref<64x64xf32, #tpu.memory_space<any>>) target_semaphore(%5 : memref<!tpu.dma_semaphore, #tpu.memory_space<semaphore_mem>>)
    %c2_i32 = arith.constant 2 : i32
    %c1_i32 = arith.constant 1 : i32
    %c1_i32_6 = arith.constant 1 : i32
    %c0_i32_7 = arith.constant 0 : i32
    %c0_i32_8 = arith.constant 0 : i32
    %6 = tpu.memref_slice %arg0[%c2_i32, %c0_i32_7, %c0_i32_8] : memref<3x64x64xf32, #tpu.memory_space<any>> -> memref<1x64x64xf32, #tpu.memory_space<any>>
    %7 = tpu.memref_squeeze %6 : memref<1x64x64xf32, #tpu.memory_space<any>> -> memref<64x64xf32, #tpu.memory_space<any>>
    %c0_i32_9 = arith.constant 0 : i32
    %c0_i32_10 = arith.constant 0 : i32
    %8 = tpu.memref_slice %arg1[%c1_i32, %c0_i32_9, %c0_i32_10] : memref<3x64x64xf32, #tpu.memory_space<any>> -> memref<1x64x64xf32, #tpu.memory_space<any>>
    %9 = tpu.memref_squeeze %8 : memref<1x64x64xf32, #tpu.memory_space<any>> -> memref<64x64xf32, #tpu.memory_space<any>>
    %10 = tpu.memref_slice %arg2[%c1_i32_6] : memref<3x!tpu.dma_semaphore, #tpu.memory_space<semaphore_mem>> -> memref<1x!tpu.dma_semaphore, #tpu.memory_space<semaphore_mem>>
    %11 = tpu.memref_squeeze %10 : memref<1x!tpu.dma_semaphore, #tpu.memory_space<semaphore_mem>> -> memref<!tpu.dma_semaphore, #tpu.memory_space<semaphore_mem>>
    tpu.enqueue_dma source(%7 : memref<64x64xf32, #tpu.memory_space<any>>) target(%9 : memref<64x64xf32, #tpu.memory_space<any>>) target_semaphore(%11 : memref<!tpu.dma_semaphore, #tpu.memory_space<semaphore_mem>>)
    %c1_i32_11 = arith.constant 1 : i32
    %c2_i32_12 = arith.constant 2 : i32
    %c2_i32_13 = arith.constant 2 : i32
    %c0_i32_14 = arith.constant 0 : i32
    %c0_i32_15 = arith.constant 0 : i32
    %12 = tpu.memref_slice %arg0[%c1_i32_11, %c0_i32_14, %c0_i32_15] : memref<3x64x64xf32, #tpu.memory_space<any>> -> memref<1x64x64xf32, #tpu.memory_space<any>>
    %13 = tpu.memref_squeeze %12 : memref<1x64x64xf32, #tpu.memory_space<any>> -> memref<64x64xf32, #tpu.memory_space<any>>
    %c0_i32_16 = arith.constant 0 : i32
    %c0_i32_17 = arith.constant 0 : i32
    %14 = tpu.memref_slice %arg1[%c2_i32_12, %c0_i32_16, %c0_i32_17] : memref<3x64x64xf32, #tpu.memory_space<any>> -> memref<1x64x64xf32, #tpu.memory_space<any>>
    %15 = tpu.memref_squeeze %14 : memref<1x64x64xf32, #tpu.memory_space<any>> -> memref<64x64xf32, #tpu.memory_space<any>>
    %16 = tpu.memref_slice %arg2[%c2_i32_13] : memref<3x!tpu.dma_semaphore, #tpu.memory_space<semaphore_mem>> -> memref<1x!tpu.dma_semaphore, #tpu.memory_space<semaphore_mem>>
    %17 = tpu.memref_squeeze %16 : memref<1x!tpu.dma_semaphore, #tpu.memory_space<semaphore_mem>> -> memref<!tpu.dma_semaphore, #tpu.memory_space<semaphore_mem>>
    tpu.enqueue_dma source(%13 : memref<64x64xf32, #tpu.memory_space<any>>) target(%15 : memref<64x64xf32, #tpu.memory_space<any>>) target_semaphore(%17 : memref<!tpu.dma_semaphore, #tpu.memory_space<semaphore_mem>>)
    %c0_i32_18 = arith.constant 0 : i32
    %c0_i32_19 = arith.constant 0 : i32
    %c0_i32_20 = arith.constant 0 : i32
    %c0_i32_21 = arith.constant 0 : i32
    %c0_i32_22 = arith.constant 0 : i32
    %18 = tpu.memref_slice %arg0[%c0_i32_18, %c0_i32_21, %c0_i32_22] : memref<3x64x64xf32, #tpu.memory_space<any>> -> memref<1x64x64xf32, #tpu.memory_space<any>>
    %19 = tpu.memref_squeeze %18 : memref<1x64x64xf32, #tpu.memory_space<any>> -> memref<64x64xf32, #tpu.memory_space<any>>
    %c0_i32_23 = arith.constant 0 : i32
    %c0_i32_24 = arith.constant 0 : i32
    %20 = tpu.memref_slice %arg1[%c0_i32_19, %c0_i32_23, %c0_i32_24] : memref<3x64x64xf32, #tpu.memory_space<any>> -> memref<1x64x64xf32, #tpu.memory_space<any>>
    %21 = tpu.memref_squeeze %20 : memref<1x64x64xf32, #tpu.memory_space<any>> -> memref<64x64xf32, #tpu.memory_space<any>>
    %22 = tpu.memref_slice %arg2[%c0_i32_20] : memref<3x!tpu.dma_semaphore, #tpu.memory_space<semaphore_mem>> -> memref<1x!tpu.dma_semaphore, #tpu.memory_space<semaphore_mem>>
    %23 = tpu.memref_squeeze %22 : memref<1x!tpu.dma_semaphore, #tpu.memory_space<semaphore_mem>> -> memref<!tpu.dma_semaphore, #tpu.memory_space<semaphore_mem>>
    tpu.wait_dma2 semaphore(%23 : memref<!tpu.dma_semaphore, #tpu.memory_space<semaphore_mem>>) src(%19 : memref<64x64xf32, #tpu.memory_space<any>>) dst(%21 : memref<64x64xf32, #tpu.memory_space<any>>)
    %c2_i32_25 = arith.constant 2 : i32
    %c1_i32_26 = arith.constant 1 : i32
    %c1_i32_27 = arith.constant 1 : i32
    %c0_i32_28 = arith.constant 0 : i32
    %c0_i32_29 = arith.constant 0 : i32
    %24 = tpu.memref_slice %arg0[%c2_i32_25, %c0_i32_28, %c0_i32_29] : memref<3x64x64xf32, #tpu.memory_space<any>> -> memref<1x64x64xf32, #tpu.memory_space<any>>
    %25 = tpu.memref_squeeze %24 : memref<1x64x64xf32, #tpu.memory_space<any>> -> memref<64x64xf32, #tpu.memory_space<any>>
    %c0_i32_30 = arith.constant 0 : i32
    %c0_i32_31 = arith.constant 0 : i32
    %26 = tpu.memref_slice %arg1[%c1_i32_26, %c0_i32_30, %c0_i32_31] : memref<3x64x64xf32, #tpu.memory_space<any>> -> memref<1x64x64xf32, #tpu.memory_space<any>>
    %27 = tpu.memref_squeeze %26 : memref<1x64x64xf32, #tpu.memory_space<any>> -> memref<64x64xf32, #tpu.memory_space<any>>
    %28 = tpu.memref_slice %arg2[%c1_i32_27] : memref<3x!tpu.dma_semaphore, #tpu.memory_space<semaphore_mem>> -> memref<1x!tpu.dma_semaphore, #tpu.memory_space<semaphore_mem>>
    %29 = tpu.memref_squeeze %28 : memref<1x!tpu.dma_semaphore, #tpu.memory_space<semaphore_mem>> -> memref<!tpu.dma_semaphore, #tpu.memory_space<semaphore_mem>>
    tpu.wait_dma2 semaphore(%29 : memref<!tpu.dma_semaphore, #tpu.memory_space<semaphore_mem>>) src(%25 : memref<64x64xf32, #tpu.memory_space<any>>) dst(%27 : memref<64x64xf32, #tpu.memory_space<any>>)
    %c1_i32_32 = arith.constant 1 : i32
    %c2_i32_33 = arith.constant 2 : i32
    %c2_i32_34 = arith.constant 2 : i32
    %c0_i32_35 = arith.constant 0 : i32
    %c0_i32_36 = arith.constant 0 : i32
    %30 = tpu.memref_slice %arg0[%c1_i32_32, %c0_i32_35, %c0_i32_36] : memref<3x64x64xf32, #tpu.memory_space<any>> -> memref<1x64x64xf32, #tpu.memory_space<any>>
    %31 = tpu.memref_squeeze %30 : memref<1x64x64xf32, #tpu.memory_space<any>> -> memref<64x64xf32, #tpu.memory_space<any>>
    %c0_i32_37 = arith.constant 0 : i32
    %c0_i32_38 = arith.constant 0 : i32
    %32 = tpu.memref_slice %arg1[%c2_i32_33, %c0_i32_37, %c0_i32_38] : memref<3x64x64xf32, #tpu.memory_space<any>> -> memref<1x64x64xf32, #tpu.memory_space<any>>
    %33 = tpu.memref_squeeze %32 : memref<1x64x64xf32, #tpu.memory_space<any>> -> memref<64x64xf32, #tpu.memory_space<any>>
    %34 = tpu.memref_slice %arg2[%c2_i32_34] : memref<3x!tpu.dma_semaphore, #tpu.memory_space<semaphore_mem>> -> memref<1x!tpu.dma_semaphore, #tpu.memory_space<semaphore_mem>>
    %35 = tpu.memref_squeeze %34 : memref<1x!tpu.dma_semaphore, #tpu.memory_space<semaphore_mem>> -> memref<!tpu.dma_semaphore, #tpu.memory_space<semaphore_mem>>
    tpu.wait_dma2 semaphore(%35 : memref<!tpu.dma_semaphore, #tpu.memory_space<semaphore_mem>>) src(%31 : memref<64x64xf32, #tpu.memory_space<any>>) dst(%33 : memref<64x64xf32, #tpu.memory_space<any>>)
    return
  }
}

</mosaic_0001>

<llo_original>
// kernel: tpu_custom_call.1
$region0: #{tpu_custom_call.1}
  #allocation0 [shape = 'u32[]', space=smem, size = 0x4, offset = 0x4, fixed_abs, tag = 'smem constant byte address 0x4 - core index']
  #allocation1 [shape = 'u32[144,128]{1,0:T(1,128)}', space=vmem, size = 0x12000, scoped, tag = 'internal scratch']
  #allocation2 [shape = 's32[3]{0}', space=sflag, size = 0xc, scoped, tag = 'scratch operand']
  #allocation3 [shape = 's32[]', space=sflag, size = 0x4, offset = 0, fixed_abs, tag = 'sflag constant byte address 0x0 - dummy sync flag']
  #allocation4 [shape = 'u32[0]{0}', space=smem, size = 0, offset = 0, fixed_abs, tag = 'smem constant byte address 0x0 - null']
  #allocation5 [shape = 's32[]', space=sflag, size = 0x4, offset = 0, fixed_abs, tag = 'sflag constant byte address 0x0 - dummy sync flag']
  #allocation6 [shape = 'u32[0]{0}', space=smem, size = 0, offset = 0, fixed_abs, tag = 'smem constant byte address 0x0 - null']
  #allocation7 [shape = 's32[]', space=sflag, size = 0x4, offset = 0, fixed_abs, tag = 'sflag constant byte address 0x0 - dummy sync flag']
  #allocation8 [shape = 'u32[0]{0}', space=smem, size = 0, offset = 0, fixed_abs, tag = 'smem constant byte address 0x0 - null']
  %s0 = inlined_call_operand.hbm [shape: f32[3,64,64], index: 0, kind: input, shape index: {}]
  %s1 = inlined_call_operand.hbm [shape: f32[3,64,64], index: 1, kind: output, shape index: {}]
  %s2 = sld [smem:[#allocation0]]
  $region2: #{tpu_custom_call.1} parent=0
    _
  %s4 = ssub.s32 1, %s2
  %s5 = scalar_select 0, %s4, %s2
  %s7 = sshll.u32 1, 14
  %s8 = sxor.u32 4294967295, %s7
  %12 = dma.general %s0, 1024, %s1, [#allocation2], 131072, [#allocation4], 0, 0
  %s13 = scalar_lea.hbm %s0, 2048
  %s14 = scalar_lea.hbm %s1, 1024
  %s15 = scalar_lea.sflag [#allocation2], 1
  %s17 = sshll.u32 1, 14
  %s18 = sxor.u32 4294967295, %s17
  %22 = dma.general %s13, 1024, %s14, %s15, 131072, [#allocation6], 0, 0
  %s23 = scalar_lea.hbm %s0, 1024
  %s24 = scalar_lea.hbm %s1, 2048
  %s25 = scalar_lea.sflag [#allocation2], 2
  %s27 = sshll.u32 1, 14
  %s28 = sxor.u32 4294967295, %s27
  %32 = dma.general %s23, 1024, %s24, %s25, 131072, [#allocation8], 0, 0
  %s33 = smul.u32 64, 1
  %s34 = sshll.u32 %s33, 4
  %35 = dma.done [#allocation2], %s34
  %s36 = sshll.u32 %s33, 4
  %37 = dma.done %s15, %s36
  %s38 = sshll.u32 %s33, 4
  %39 = dma.done %s25, %s38
  %40 = vsyncmov [#allocation2]
  %s41 = vpop.sfrf %40
  %p42 = scmp.eq.s32.totalorder %s41, 0
  %p43 = pneg %p42
  %45 = shalt.err (%p43)
  %s46 = scalar_lea.sflag [#allocation2], 1
  %47 = vsyncmov %s46
  %s48 = vpop.sfrf %47
  %p49 = scmp.eq.s32.totalorder %s48, 0
  %p50 = pneg %p49
  %52 = shalt.err (%p50)
  %s53 = scalar_lea.sflag [#allocation2], 2
  %54 = vsyncmov %s53
  %s55 = vpop.sfrf %54
  %p56 = scmp.eq.s32.totalorder %s55, 0
  %p57 = pneg %p56
  %59 = shalt.err (%p57)

</llo_original>
